<compile_context>
chip_gen: v6e
topology: v6e:2x2x1
jax: 0.10.0
libtpu: 0.0.40
codegen_flags: <defaults>
</compile_context>

<pallas_src>
import numpy as np
import jax
import jax.numpy as jnp
from jax import lax
from jax.experimental import pallas as pl
from jax.experimental.pallas import tpu as pltpu

LANE = 128                      # lane width (last dim of the slab)
NCORES = 2                      # leading parallel axis for the reduction pass (both TCs on v7x)
VMEM_LIMIT = 32 * 1024 * 1024   # safe on v5e/v6e (128 MiB) and v7x (64 MiB physical)


# ---------------- fused single-pass kernel (whole tensor resident in VMEM) ----------------
def _make_fused_kernel(n, num_bins, bias):
    num_bins_f = float(num_bins)
    bias_f = float(bias)
    inv_n = 1.0 / float(n)
    inv_sqrt_bins = 1.0 / float(np.sqrt(num_bins))

    def kernel(x_ref, o_ref, ss_ref):
        x = x_ref[...].astype(jnp.float32)
        abs_sum = jnp.sum(jnp.abs(x))                    # padded tail (if any) is zeros
        step_size = 2.0 * abs_sum * inv_n * inv_sqrt_bins
        ss_ref[...] = jnp.full((1, 1), step_size, dtype=jnp.float32)
        scale = step_size + 1e-7
        inv_scale = 1.0 / scale                          # exact scalar divide, once
        t = x * inv_scale - bias_f
        vbar = jnp.round(jnp.clip(t, 0.0, num_bins_f))
        o_ref[...] = ((vbar + bias_f) * scale).astype(o_ref.dtype)

    return kernel


# ---------------- pass 1: sum(|x|) reduction ----------------
def _make_abs_sum_kernel(block_rows, rows, half_blocks, need_mask):
    def kernel(x_ref, out_ref, acc_ref):
        c = pl.program_id(0)
        j = pl.program_id(1)

        @pl.when(j == 0)
        def _():
            acc_ref[...] = jnp.zeros_like(acc_ref)

        a = jnp.abs(x_ref[...].astype(jnp.float32))
        if need_mask:
            # mask rows past the logical array (partial last block / clamped overhang block)
            b = c * half_blocks + j                      # logical block index
            row_ids = b * block_rows + lax.broadcasted_iota(
                jnp.int32, (block_rows, LANE), 0)
            a = jnp.where(row_ids < rows, a, 0.0)
        acc_ref[...] += a                                # pure VPU elementwise adds

        @pl.when(j == pl.num_programs(1) - 1)
        def _():
            s = jnp.sum(acc_ref[...])                    # single cross-lane reduce per core
            out_ref[...] = jnp.full((8, LANE), s, dtype=jnp.float32)

    return kernel


# ---------------- pass 2: elementwise LSQ quantization ----------------
def _make_quant_kernel(num_bins, bias):
    num_bins_f = float(num_bins)
    bias_f = float(bias)

    def kernel(scale_ref, x_ref, o_ref):
        scale = scale_ref[0] + jnp.float32(1e-7)
        inv_scale = 1.0 / scale                          # exact scalar divide, once per block
        t = x_ref[...].astype(jnp.float32) * inv_scale - bias_f
        vbar = jnp.round(jnp.clip(t, 0.0, num_bins_f))
        o_ref[...] = ((vbar + bias_f) * scale).astype(o_ref.dtype)

    return kernel


def lsq_per_tensor_forward(x, bits=8, symm=True, *, block_rows=1024,
                           fused_max_bytes=2 * 1024 * 1024):
    """LSQPerTensor forward (initializing call). Returns (quantized, step_size)."""
    num_bins = 2 ** bits - 1
    bias = -num_bins / 2.0 if symm else 0.0

    orig_shape = x.shape
    orig_dtype = x.dtype
    n = int(np.prod(orig_shape))

    xf = jnp.reshape(x, (-1,))
    pad = (-n) % LANE
    if pad:                                              # tiny pad only for ragged sizes
        xf = jnp.concatenate([xf, jnp.zeros((pad,), orig_dtype)])
    x2 = xf.reshape(-1, LANE)                            # lane-dense (rows, 128) slab
    rows = x2.shape[0]

    if rows * LANE * 4 <= fused_max_bytes:
        # ---------- fused single-pass: one HBM read, one HBM write ----------
        q2, ss = pl.pallas_call(
            _make_fused_kernel(n, num_bins, bias),
            out_shape=(jax.ShapeDtypeStruct(x2.shape, orig_dtype),
                       jax.ShapeDtypeStruct((1, 1), jnp.float32)),
            compiler_params=pltpu.CompilerParams(vmem_limit_bytes=VMEM_LIMIT),
        )(x2)
        step_size = ss[0, 0]
    else:
        # ---------- two-pass tiled path ----------
        num_blocks = -(-rows // block_rows)
        half_blocks = -(-num_blocks // NCORES)
        need_mask = (NCORES * half_blocks * block_rows) != rows

        if num_blocks % NCORES == 0:
            in_map = lambda c, j: (c * half_blocks + j, 0)
        else:  # clamp the DMA for the (fully masked) overhang block
            in_map = lambda c, j: (jnp.minimum(c * half_blocks + j, num_blocks - 1), 0)

        partials = pl.pallas_call(
            _make_abs_sum_kernel(block_rows, rows, half_blocks, need_mask),
            out_shape=jax.ShapeDtypeStruct((NCORES * 8, LANE), jnp.float32),
            grid=(NCORES, half_blocks),
            in_specs=[pl.BlockSpec((block_rows, LANE), in_map)],
            out_specs=pl.BlockSpec((8, LANE), lambda c, j: (c, 0)),
            scratch_shapes=[pltpu.VMEM((block_rows, LANE), jnp.float32)],
            compiler_params=pltpu.CompilerParams(
                dimension_semantics=("parallel", "arbitrary"),
                vmem_limit_bytes=VMEM_LIMIT),
        )(x2)
        abs_sum = jnp.sum(partials[0::8, 0])             # one scalar per core

        step_size = 2.0 * (abs_sum / jnp.float32(n)) / np.float32(np.sqrt(num_bins))
        scale = jnp.reshape(step_size, (1,)).astype(jnp.float32)

        q2 = pl.pallas_call(
            _make_quant_kernel(num_bins, bias),
            out_shape=jax.ShapeDtypeStruct(x2.shape, orig_dtype),
            grid=(num_blocks,),
            in_specs=[
                pl.BlockSpec(memory_space=pltpu.MemorySpace.SMEM),    # scalar scale
                pl.BlockSpec((block_rows, LANE), lambda i: (i, 0)),
            ],
            out_specs=pl.BlockSpec((block_rows, LANE), lambda i: (i, 0)),
            compiler_params=pltpu.CompilerParams(
                dimension_semantics=("parallel",),
                vmem_limit_bytes=VMEM_LIMIT),
        )(scale, x2)

    if pad:
        q = q2.reshape(-1)[:n].reshape(orig_shape)
    else:
        q = q2.reshape(orig_shape)
    return q, step_size


def _lsq_reference(x, bits=8, symm=True):
    num_bins = 2 ** bits - 1
    xf = x.astype(jnp.float32)
    step_size = 2.0 * jnp.mean(jnp.abs(xf)) / np.sqrt(num_bins)
    scale = step_size + 1e-7
    bias = -num_bins / 2.0 if symm else 0.0
    t = xf / scale - bias
    vbar = jnp.round(jnp.clip(t, 0.0, float(num_bins)))
    return (vbar + bias) * scale, step_size


if __name__ == "__main__":
    key = jax.random.PRNGKey(0)
    k1, k2 = jax.random.split(key)

    # --- test 1: small NCHW activation -> fused single-pass path ---
    x = jax.random.normal(k1, (2, 4, 16, 16), dtype=jnp.float32)
    q, step_size = lsq_per_tensor_forward(x, bits=8, symm=True)
    q = jax.block_until_ready(q)

    q_ref, ss_ref = _lsq_reference(x, bits=8, symm=True)
    scale_val = float(ss_ref) + 1e-7
    max_err = float(jnp.max(jnp.abs(q - q_ref)))
    assert max_err <= 1.001 * scale_val, f"fused: max_err={max_err}, scale={scale_val}"
    assert abs(float(step_size) - float(ss_ref)) <= 1e-5 * max(1.0, abs(float(ss_ref)))

    # --- test 2: ragged size, non-symm, forced two-pass tiled path (masking + partial blocks) ---
    xb = jnp.abs(jax.random.normal(k2, (2, 4, 24, 25), dtype=jnp.float32))  # 4800 elems (not %128)
    qb, ssb = lsq_per_tensor_forward(xb, bits=4, symm=False,
                                     block_rows=16, fused_max_bytes=0)
    qb = jax.block_until_ready(qb)

    qb_ref, ssb_ref = _lsq_reference(xb, bits=4, symm=False)
    scaleb = float(ssb_ref) + 1e-7
    max_err_b = float(jnp.max(jnp.abs(qb - qb_ref)))
    assert max_err_b <= 1.001 * scaleb, f"tiled: max_err={max_err_b}, scale={scaleb}"
    assert abs(float(ssb) - float(ssb_ref)) <= 1e-5 * max(1.0, abs(float(ssb_ref)))

    print("KERNEL_OK")
</pallas_src>

<mosaic_0001>
module attributes {stable_mosaic.version = 11 : i64} {
  func.func @kernel(%arg0: memref<16x128xf32, #tpu.memory_space<vmem>>, %arg1: memref<16x128xf32, #tpu.memory_space<vmem>>, %arg2: memref<1x1xf32, #tpu.memory_space<vmem>>) attributes {dimension_semantics = [], scalar_prefetch = 0 : i64, scratch_operands = 0 : i64, tpu.core_type = #tpu.core_type<tc>} {
    %c0 = arith.constant 0 : index
    %c0_0 = arith.constant 0 : index
    %0 = vector.load %arg0[%c0, %c0_0] : memref<16x128xf32, #tpu.memory_space<vmem>>, vector<16x128xf32>
    %1 = math.absf %0 : vector<16x128xf32>
    %2 = vector.shape_cast %1 : vector<16x128xf32> to vector<1x16x128xf32>
    %cst = arith.constant dense<0.000000e+00> : vector<1xf32>
    %3 = vector.multi_reduction <add>, %2, %cst [1, 2] : vector<1x16x128xf32> to vector<1xf32>
    %4 = vector.shape_cast %3 : vector<1xf32> to vector<1x1x1xf32>
    %5 = vector.extract %4[0, 0, 0] : f32 from vector<1x1x1xf32>
    %cst_1 = arith.constant 2.000000e+00 : f32
    %6 = arith.mulf %cst_1, %5 : f32
    %cst_2 = arith.constant 4.8828125E-4 : f32
    %7 = arith.mulf %6, %cst_2 : f32
    %cst_3 = arith.constant 0.0626224279 : f32
    %8 = arith.mulf %7, %cst_3 : f32
    %9 = vector.broadcast %8 : f32 to vector<1x1xf32>
    %c0_4 = arith.constant 0 : index
    %c0_5 = arith.constant 0 : index
    %10 = vector.load %arg2[%c0_4, %c0_5] : memref<1x1xf32, #tpu.memory_space<vmem>>, vector<1x1xf32>
    tpu.vector_store %arg2[%c0_4, %c0_5], %9 {strides = array<i32>} : memref<1x1xf32, #tpu.memory_space<vmem>>, vector<1x1xf32>,
    %cst_6 = arith.constant 1.000000e-07 : f32
    %11 = arith.addf %8, %cst_6 : f32
    %cst_7 = arith.constant 1.000000e+00 : f32
    %12 = arith.divf %cst_7, %11 : f32
    %13 = vector.broadcast %12 : f32 to vector<16x128xf32>
    %14 = arith.mulf %0, %13 : vector<16x128xf32>
    %cst_8 = arith.constant -1.275000e+02 : f32
    %15 = vector.broadcast %cst_8 : f32 to vector<16x128xf32>
    %16 = arith.subf %14, %15 : vector<16x128xf32>
    %cst_9 = arith.constant 0.000000e+00 : f32
    %cst_10 = arith.constant 2.550000e+02 : f32
    %17 = vector.broadcast %cst_9 : f32 to vector<16x128xf32>
    %18 = arith.maximumf %17, %16 : vector<16x128xf32>
    %19 = vector.broadcast %cst_10 : f32 to vector<16x128xf32>
    %20 = arith.minimumf %19, %18 : vector<16x128xf32>
    %21 = math.roundeven %20 : vector<16x128xf32>
    %cst_11 = arith.constant -1.275000e+02 : f32
    %22 = vector.broadcast %cst_11 : f32 to vector<16x128xf32>
    %23 = arith.addf %21, %22 : vector<16x128xf32>
    %24 = vector.broadcast %11 : f32 to vector<16x128xf32>
    %25 = arith.mulf %23, %24 : vector<16x128xf32>
    %c0_12 = arith.constant 0 : index
    %c0_13 = arith.constant 0 : index
    %26 = vector.load %arg1[%c0_12, %c0_13] : memref<16x128xf32, #tpu.memory_space<vmem>>, vector<16x128xf32>
    tpu.vector_store %arg1[%c0_12, %c0_13], %25 {strides = array<i32>} : memref<16x128xf32, #tpu.memory_space<vmem>>, vector<16x128xf32>,
    return
  }
}

</mosaic_0001>

<llo_original>
// kernel: tpu_custom_call.1
$region0: #{tpu_custom_call.1}
  #allocation0 [shape = 'u32[]', space=smem, size = 0x4, offset = 0x4, fixed_abs, tag = 'smem constant byte address 0x4 - core index']
  #allocation1 [shape = 'u32[144,128]{1,0:T(1,128)}', space=vmem, size = 0x12000, scoped, tag = 'internal scratch']
  %s0 = inlined_call_operand.hbm [shape: f32[16,128], index: 0, kind: input, shape index: {}]
  %s1 = inlined_call_operand.hbm [shape: f32[16,128], index: 1, kind: output, shape index: {0}]
  %s2 = inlined_call_operand.hbm [shape: f32[1,1], index: 2, kind: output, shape index: {1}]
  %3 = xla_tuple %s1, %s2
  %s4 = sld [smem:[#allocation0]]
  $region26: #{tpu_custom_call.1} parent=0
    _
  %s6 = ssub.s32 1, %s4
  %s7 = scalar_select 0, %s6, %s4
  $region1: #{tpu_custom_call.1} parent=0
    #allocation2 [shape = 'u8[8192]{0}', space=vmem, size = 0x2000, scoped, tag = 'input window, operand 0, single buffered']
    #allocation3 [shape = 's32[1]{0}', space=sflag, size = 0x4, scoped, tag = 'scoped memory for tpu_custom_call.1']
    #allocation4 [shape = 's32[1]{0}', space=sflag, size = 0x4, scoped, tag = 'scoped memory for tpu_custom_call.1']
    #allocation5 [shape = 'u8[8192]{0}', space=vmem, size = 0x2000, scoped, tag = 'output window, operand 0, single buffered']
    #allocation6 [shape = 'u8[512]{0}', space=vmem, size = 0x400, scoped, tag = 'output window, operand 1, single buffered']
    #allocation7 [shape = 's32[1]{0}', space=sflag, size = 0x4, scoped, tag = 'scoped memory for tpu_custom_call.1']
    %8 = vsyncpa [#allocation3], 0
    %9 = vsyncpa [#allocation4], 0
    %10 = vsyncpa [#allocation7], 0
    // Predicated region
    $region2: #{tpu_custom_call.1} parent=1 // pred_check
      _
    $region3: #{tpu_custom_call.1} parent=1 // pred_check_branch
      %12 = sbr.rel (0) target = $region5
    $region4: #{tpu_custom_call.1} parent=1 // pred_region
      %s14 = ssub.s32 256, 256
      %15 = vsyncadd [#allocation3], %s14
      %s16 = sshll.u32 [#allocation2], 4
      %s17 = int_to_ptr.vmem [resolvable:$true] %s16
      %22 = dma.hbm_to_vmem [thread:$0]  %s0, 256, %s17, [#allocation3], 128, 128, 8
    $region5: #{tpu_custom_call.1} parent=1 // pred_fallthru
      _
    // Predicated region
    $region6: #{tpu_custom_call.1} parent=1 // pred_check
      _
    $region7: #{tpu_custom_call.1} parent=1 // pred_check_branch
      %24 = sbr.rel (0) target = $region9
    $region8: #{tpu_custom_call.1} parent=1 // pred_region
      %25 = dma.done [#allocation3], 256
    $region9: #{tpu_custom_call.1} parent=1 // pred_fallthru
      _
    %v26 = vld [vmem:[#allocation2] sm:$0xff]
    %v27 = vld [vmem:[#allocation2 + $0x8] sm:$0xff]
    %v28 = vand.u32 2147483647, %v26
    %v29 = vand.u32 2147483647, %v27
    %v30 = vadd.f32 %v28, %v29
    %31 = vadd.xlane.f32.xlu0 %v30
    %v32 = vpop.xlane.xlu0 %31
    %v33 = vrot.slane %v32, 4
    %v34 = vadd.f32 %v32, %v33
    %v35 = vrot.slane %v34, 2
    %v36 = vadd.f32 %v34, %v35
    %v37 = vrot.slane %v36, 1
    %v38 = vadd.f32 %v36, %v37
    %s39 = vtos %v38
    %s40 = smul.f32 %s39, 2.0
    %s41 = smul.f32 %s40, 0.00048828125
    %s42 = smul.f32 %s41, 0.06262243
    %v43 = vstv %s42
    %vm44 = vcmask 0
    %45 = vst.msk [vmem:[#allocation6] sm:$0x1] %vm44, %v43
    %s46 = sadd.f32 %s42, 1e-07
    %v47 = vstv %s46
    %v48 = vrcp.pop %v47
    %s49 = vtos %v48
    %v50 = vstv %s49
    %v51 = vmul.f32 %v26, %v50
    %v52 = vmul.f32 %v27, %v50
    %v53 = vsub.f32 %v51, -127.5
    %v54 = vsub.f32 %v52, -127.5
    %v55 = vmax.f32 %v53, 0.0
    %v56 = vmax.f32 %v54, 0.0
    %v57 = vmin.f32 %v55, 255.0
    %v58 = vmin.f32 %v56, 255.0
    %v59 = vround.ne.pseudo %v57
    %v60 = vround.ne.pseudo %v58
    %v61 = vadd.f32 %v59, -127.5
    %v62 = vadd.f32 %v60, -127.5
    %v63 = vstv %s46
    %v64 = vmul.f32 %v61, %v63
    %v65 = vmul.f32 %v62, %v63
    %66 = vst [vmem:[#allocation5] sm:$0xff] %v64
    %67 = vst [vmem:[#allocation5 + $0x8] sm:$0xff] %v65
    // Predicated region
    $region10: #{tpu_custom_call.1} parent=1 // pred_check
      _
    $region11: #{tpu_custom_call.1} parent=1 // pred_check_branch
      %69 = sbr.rel (0) target = $region13
    $region12: #{tpu_custom_call.1} parent=1 // pred_region
      %s71 = ssub.s32 256, 256
      %72 = vsyncadd [#allocation4], %s71
      %s73 = sshll.u32 [#allocation5], 4
      %s74 = int_to_ptr.vmem [resolvable:$true] %s73
      %79 = dma.vmem_to_hbm [thread:$0]  %s74, 256, %s1, [#allocation4], 128, 128, 8
    $region13: #{tpu_custom_call.1} parent=1 // pred_fallthru
      _
    // Predicated region
    $region14: #{tpu_custom_call.1} parent=1 // pred_check
      _
    $region15: #{tpu_custom_call.1} parent=1 // pred_check_branch
      %81 = sbr.rel (0) target = $region17
    $region16: #{tpu_custom_call.1} parent=1 // pred_region
      %s83 = ssub.s32 16, 16
      %84 = vsyncadd [#allocation7], %s83
      %s86 = sshll.u32 [#allocation6], 4
      %s87 = int_to_ptr.vmem [resolvable:$true] %s86
      %89 = dma.vmem_to_hbm [thread:$0]  %s87, 16, %s2, [#allocation7]
    $region17: #{tpu_custom_call.1} parent=1 // pred_fallthru
      _
    // Predicated region
    $region18: #{tpu_custom_call.1} parent=1 // pred_check
      _
    $region19: #{tpu_custom_call.1} parent=1 // pred_check_branch
      %91 = sbr.rel (0) target = $region21
    $region20: #{tpu_custom_call.1} parent=1 // pred_region
      %92 = dma.done [#allocation4], 256
    $region21: #{tpu_custom_call.1} parent=1 // pred_fallthru
      _
    // Predicated region
    $region22: #{tpu_custom_call.1} parent=1 // pred_check
      _
    $region23: #{tpu_custom_call.1} parent=1 // pred_check_branch
      %94 = sbr.rel (0) target = $region25
    $region24: #{tpu_custom_call.1} parent=1 // pred_region
      %95 = dma.done [#allocation7], 16
    $region25: #{tpu_custom_call.1} parent=1 // pred_fallthru
      _
    %96 = vsyncpa [#allocation3], 1
    %97 = vsyncpa [#allocation4], 1
    %98 = vsyncpa [#allocation7], 1

</llo_original>
